<compile_context>
chip_gen: v7x
topology: tpu7x:2x2x1
jax: 0.10.0
libtpu: 0.0.40
codegen_flags: <defaults>
</compile_context>

<pallas_src>
import functools
import math

import jax
import jax.numpy as jnp
from jax.experimental import pallas as pl
from jax.experimental.pallas import tpu as pltpu


def _round_up(v: int, m: int) -> int:
    return (v + m - 1) // m * m


def _ranpac_kernel(scales_ref, x_ref, w_ref, o_ref, *,
                   proj_per_tile: int, non_linearities: str,
                   negative_slope: float, scale_after_act: bool):
    """One (partial-split c, D-tile d, reduction step j) grid point.

    scales_ref: SMEM (2,) f32  -- [pre_activation_scale, epilogue_scale]
    x_ref:      VMEM [B, K] bf16            (resident across the whole grid)
    w_ref:      VMEM [ppt, K, td] bf16 weight tile (pipelined / double-buffered)
    o_ref:      VMEM [B, td] f32            (same block across the reduction axis
                                             -> resident accumulator, no scratch)
    """
    j = pl.program_id(2)

    @pl.when(j == 0)
    def _():
        o_ref[...] = jnp.zeros_like(o_ref)

    x = x_ref[...]

    def one_projection(p):
        # [B,K] @ [K,td] -> [B,td] f32 on the MXU; only one [B,td] slab live at
        # a time (no [B, ppt*td] intermediate).
        y = jnp.dot(x, w_ref[p], preferred_element_type=jnp.float32)
        if not scale_after_act:
            y = y * scales_ref[0]
        if non_linearities == "leaky_relu":
            y = jnp.where(y >= 0, y, negative_slope * y)
        elif non_linearities == "relu":
            y = jnp.maximum(y, 0.0)
        elif non_linearities == "sigmoid":
            y = jax.nn.sigmoid(y)
        elif non_linearities == "tanh":
            y = jnp.tanh(y)
        else:
            raise ValueError(f"unsupported non_linearities: {non_linearities}")
        return y

    part = one_projection(0)
    for p in range(1, proj_per_tile):
        part = part + one_projection(p)
    o_ref[...] += part

    @pl.when(j == pl.num_programs(2) - 1)
    def _():
        # Single epilogue multiply on the small resident accumulator:
        # scale/num_projection (post mode) or 1/num_projection (pre mode).
        o_ref[...] = o_ref[...] * scales_ref[1]


def prepare_ranpac_weight(weight, num_projection: int, output_dim: int):
    """One-time prep of the frozen projection weight (do this at module init).

    weight: [num_projection*output_dim, input_dim] f32 (PyTorch nn.Linear layout)
    returns: [num_projection, input_dim, d_pad] bf16,
             d_pad = output_dim rounded up to 128 lanes (zero padded).
    """
    w = jnp.asarray(weight, jnp.float32)
    n, input_dim = w.shape
    assert n == num_projection * output_dim
    d_pad = _round_up(output_dim, 128)
    w = w.reshape(num_projection, output_dim, input_dim)
    w = jnp.transpose(w, (0, 2, 1))                       # [P, K, D]
    if d_pad != output_dim:
        w = jnp.pad(w, ((0, 0), (0, 0), (0, d_pad - output_dim)))
    return w.astype(jnp.bfloat16)


def _tpu_budgets():
    """(max weight-tile bytes, vmem_limit cap) per TPU generation."""
    vmem_cap = 128 * 1024 * 1024
    try:
        info = pltpu.get_tpu_info()
        cap = getattr(info, "vmem_capacity_bytes", None)
        if cap:
            vmem_cap = int(cap)
    except Exception:
        pass
    if vmem_cap <= 64 * 1024 * 1024:
        # v7x-class: 64 MiB physical VMEM -> 2x14 MiB weight buffers + temps < 38 MiB.
        return 14 * 1024 * 1024, 38 * 1024 * 1024
    # v5e / v6e: 128 MiB physical VMEM.
    return 16 * 1024 * 1024, 96 * 1024 * 1024


def _choose_tiles(p_per: int, input_dim: int, d_pad: int,
                  bytes_per_elem: int, max_tile_bytes: int):
    """Pick (projections per tile, D-tile) so the weight tile fits the budget.

    Prefers full-D tiles with as many projections as fit; if even a single
    projection does not fit, tiles D in 128-lane multiples.  Never falls back
    to an unbounded full-N tile.
    """
    for ppt in range(p_per, 0, -1):
        if p_per % ppt:
            continue
        if ppt * input_dim * d_pad * bytes_per_elem <= max_tile_bytes:
            return ppt, d_pad
    m = d_pad // 128
    best_td = 128  # minimal possible tile; accepted even if over budget
    for t in range(m, 0, -1):
        if m % t:
            continue
        td = t * 128
        if input_dim * td * bytes_per_elem <= max_tile_bytes:
            best_td = td
            break
    return 1, best_td


def ranpac_forward(x, w_pkd, lambda_param, *, output_dim: int,
                   non_linearities: str = "leaky_relu",
                   negative_slope: float = 0.2,
                   clamp: bool = True,
                   max_tile_bytes=None):
    """RanPAC forward.

    x:     [B, input_dim] float (cast to bf16 for the MXU).
    w_pkd: [num_projection, input_dim, d_pad] bf16 frozen weight
           (see prepare_ranpac_weight; d_pad is output_dim padded to 128 lanes).
    """
    if non_linearities not in ("leaky_relu", "relu", "sigmoid", "tanh"):
        raise ValueError(f"unsupported non_linearities: {non_linearities}")

    B, input_dim = x.shape
    num_projection, K, d_pad = w_pkd.shape
    assert K == input_dim
    assert d_pad % 128 == 0 and d_pad >= output_dim

    default_tile, vmem_cap = _tpu_budgets()
    if max_tile_bytes is None:
        max_tile_bytes = default_tile

    sqrt_d = math.sqrt(input_dim)
    lam = jnp.asarray(lambda_param, jnp.float32)
    if clamp:
        lam = jnp.clip(lam, 0.0005, 0.5)  # lambda_param.data.clamp_(0.0005, 0.5)
    pre_scale = lam * sqrt_d

    # Fold scale + 1/num_projection into the epilogue only when provably
    # equivalent: non-negative scale and positively homogeneous activation.
    lam_concrete_nonneg = isinstance(lambda_param, (int, float)) and lambda_param >= 0
    scale_after_act = (clamp or lam_concrete_nonneg) and \
        non_linearities in ("leaky_relu", "relu")
    if scale_after_act:
        scales = jnp.stack([jnp.float32(1.0),
                            (pre_scale / num_projection).astype(jnp.float32)])
    else:
        scales = jnp.stack([pre_scale.astype(jnp.float32),
                            jnp.float32(1.0 / num_projection)])

    # Leading partial-sum split: creates a parallel grid axis (2nd TC on v7x).
    n_par = 2 if (num_projection % 2 == 0 and num_projection >= 2) else 1
    p_per = num_projection // n_par

    bpe = jnp.dtype(w_pkd.dtype).itemsize
    ppt, td = _choose_tiles(p_per, input_dim, d_pad, bpe, max_tile_bytes)
    n_red = p_per // ppt
    n_d = d_pad // td

    x_in = x.astype(jnp.bfloat16)

    kernel = functools.partial(
        _ranpac_kernel,
        proj_per_tile=ppt,
        non_linearities=non_linearities,
        negative_slope=negative_slope,
        scale_after_act=scale_after_act,
    )

    # VMEM budget: double-buffered weight tile + resident x + resident output
    # block + live [B, td] dot/activation temporaries, with headroom, capped
    # per generation.
    tile_w_bytes = ppt * input_dim * td * bpe
    x_bytes = B * input_dim * 2
    out_tile_bytes = B * td * 4
    need = 2 * tile_w_bytes + 2 * x_bytes + 2 * out_tile_bytes + 3 * out_tile_bytes
    vmem_limit = int(min(max(need + need // 4 + (1 << 20), 4 << 20), vmem_cap))

    cost = pl.CostEstimate(
        flops=2 * B * input_dim * num_projection * d_pad,
        transcendentals=(0 if non_linearities in ("leaky_relu", "relu")
                         else B * num_projection * d_pad),
        bytes_accessed=(B * input_dim * 2
                        + num_projection * input_dim * d_pad * bpe
                        + n_par * B * d_pad * 4),
    )

    grid_spec = pltpu.PrefetchScalarGridSpec(
        num_scalar_prefetch=0,
        grid=(n_par, n_d, n_red),
        in_specs=[
            # scales: tiny, whole-array SMEM residency
            pl.BlockSpec(memory_space=pltpu.MemorySpace.SMEM),
            # x: resident in VMEM across the whole grid
            pl.BlockSpec((B, input_dim), lambda c, d, j: (0, 0)),
            # weight: one (ppt, K, td) tile per step (pipelined double buffer)
            pl.BlockSpec((ppt, input_dim, td),
                         lambda c, d, j: (c * n_red + j, 0, d)),
        ],
        # Output block is constant across the reduction axis -> resident accumulator.
        out_specs=pl.BlockSpec((None, B, td), lambda c, d, j: (c, 0, d)),
    )

    partials = pl.pallas_call(
        kernel,
        out_shape=jax.ShapeDtypeStruct((n_par, B, d_pad), jnp.float32),
        grid_spec=grid_spec,
        compiler_params=pltpu.CompilerParams(
            dimension_semantics=("parallel", "parallel", "arbitrary"),
            vmem_limit_bytes=vmem_limit,
        ),
        cost_estimate=cost,
    )(scales, x_in, w_pkd)

    out = partials.sum(axis=0)           # combine partial splits (cheap, tiny)
    if d_pad != output_dim:
        out = out[:, :output_dim]        # drop lane padding
    return out


def _reference(x, weight, lambda_param, *, num_projection, output_dim,
               non_linearities="leaky_relu", negative_slope=0.2, clamp=True):
    """Pure-JAX f32 reference matching the PyTorch forward."""
    input_dim = x.shape[1]
    lam = jnp.asarray(lambda_param, jnp.float32)
    if clamp:
        lam = jnp.clip(lam, 0.0005, 0.5)
    y = x @ weight.T * lam * math.sqrt(input_dim)
    if non_linearities == "leaky_relu":
        y = jnp.where(y >= 0, y, negative_slope * y)
    elif non_linearities == "relu":
        y = jnp.maximum(y, 0.0)
    elif non_linearities == "sigmoid":
        y = jax.nn.sigmoid(y)
    elif non_linearities == "tanh":
        y = jnp.tanh(y)
    y = y.reshape(x.shape[0], num_projection, output_dim)
    return y.mean(axis=1)


if __name__ == "__main__":
    # Small, module-consistent shapes.  output_dim deliberately NOT a multiple
    # of 128 to exercise the lane-padding path.
    B = 8
    input_dim = 32
    output_dim = 100
    num_projection = 4

    key = jax.random.PRNGKey(0)
    kx, kw = jax.random.split(key)
    x = jax.random.normal(kx, (B, input_dim), dtype=jnp.float32)
    # nn.init.normal_(weight, mean=0, std=1.0), frozen.
    weight = jax.random.normal(kw, (num_projection * output_dim, input_dim),
                               dtype=jnp.float32)
    # lambda_value=None path: learnable lambda init 0.1, clamped in forward.
    lambda_param = jnp.float32(0.1)

    # One-time weight prep (frozen weight): reshape + transpose + pad + bf16.
    w_pkd = prepare_ranpac_weight(weight, num_projection, output_dim)

    # Tiny tile budget so the toy shape still exercises the multi-step
    # reduction grid + parallel partial split (1 projection per step).
    out = ranpac_forward(x, w_pkd, lambda_param, output_dim=output_dim,
                         max_tile_bytes=8 * 1024)
    out = jax.block_until_ready(out)

    ref = _reference(x, weight, lambda_param, num_projection=num_projection,
                     output_dim=output_dim)
    assert out.shape == (B, output_dim)
    max_err = float(jnp.max(jnp.abs(out - ref)))
    assert jnp.allclose(out, ref, atol=5e-2, rtol=5e-2), \
        f"leaky_relu mismatch vs reference, max abs err {max_err}"

    # Also exercise the pre-activation-scale path (tanh).
    out_t = ranpac_forward(x, w_pkd, lambda_param, output_dim=output_dim,
                           non_linearities="tanh", max_tile_bytes=8 * 1024)
    out_t = jax.block_until_ready(out_t)
    ref_t = _reference(x, weight, lambda_param, num_projection=num_projection,
                       output_dim=output_dim, non_linearities="tanh")
    max_err_t = float(jnp.max(jnp.abs(out_t - ref_t)))
    assert jnp.allclose(out_t, ref_t, atol=5e-2, rtol=5e-2), \
        f"tanh mismatch vs reference, max abs err {max_err_t}"

    print("KERNEL_OK")
</pallas_src>

<mosaic_0001>
module attributes {stable_mosaic.version = 11 : i64} {
  func.func @_ranpac_kernel(%arg0: i32, %arg1: i32, %arg2: i32, %arg3: memref<2xf32, #tpu.memory_space<smem>>, %arg4: memref<8x32xbf16, #tpu.memory_space<vmem>>, %arg5: memref<1x32x128xbf16, #tpu.memory_space<vmem>>, %arg6: memref<1x8x128xf32, #tpu.memory_space<vmem>>) attributes {dimension_semantics = [#tpu.dimension_semantics<parallel>, #tpu.dimension_semantics<parallel>, #tpu.dimension_semantics<arbitrary>], iteration_bounds = array<i64: 2, 1, 2>, scalar_prefetch = 0 : i64, scratch_operands = 0 : i64, tpu.core_type = #tpu.core_type<tc>, window_params = [{transform_indices = @transform_0, window_bounds = array<i64: 2>}, {pipeline_mode = #tpu.pipeline_mode<synchronous>, transform_indices = @transform_1, window_bounds = array<i64: 8, 32>}, {transform_indices = @transform_2, window_bounds = array<i64: 1, 32, 128>}, {transform_indices = @transform_3, window_bounds = array<i64: 1, 8, 128>}]} {
    %c0_i32 = arith.constant 0 : i32
    %0 = arith.cmpi eq, %arg2, %c0_i32 : i32
    %1 = arith.extui %0 : i1 to i32
    %c0_i32_0 = arith.constant 0 : i32
    %2 = arith.cmpi ne, %1, %c0_i32_0 : i32
    scf.if %2 {
      %cst_14 = arith.constant 0.000000e+00 : f32
      %21 = vector.broadcast %cst_14 : f32 to vector<8x128xf32>
      %c0_15 = arith.constant 0 : index
      %c0_16 = arith.constant 0 : index
      %c0_17 = arith.constant 0 : index
      %22 = vector.load %arg6[%c0_15, %c0_16, %c0_17] : memref<1x8x128xf32, #tpu.memory_space<vmem>>, vector<1x8x128xf32>
      %23 = vector.shape_cast %22 : vector<1x8x128xf32> to vector<8x128xf32>
      %24 = vector.shape_cast %21 : vector<8x128xf32> to vector<1x8x128xf32>
      tpu.vector_store %arg6[%c0_15, %c0_16, %c0_17], %24 {strides = array<i32>} : memref<1x8x128xf32, #tpu.memory_space<vmem>>, vector<1x8x128xf32>,
    } else {
    }
    %c0 = arith.constant 0 : index
    %c0_1 = arith.constant 0 : index
    %3 = vector.load %arg4[%c0, %c0_1] : memref<8x32xbf16, #tpu.memory_space<vmem>>, vector<8x32xbf16>
    %c0_2 = arith.constant 0 : index
    %c0_3 = arith.constant 0 : index
    %c0_4 = arith.constant 0 : index
    %4 = vector.load %arg5[%c0_2, %c0_3, %c0_4] : memref<1x32x128xbf16, #tpu.memory_space<vmem>>, vector<1x32x128xbf16>
    %5 = vector.shape_cast %4 : vector<1x32x128xbf16> to vector<32x128xbf16>
    %cst = arith.constant dense<0.000000e+00> : vector<8x128xf32>
    %6 = tpu.matmul %3, %5, %cst {dimension_numbers = #tpu.dot_dimension_numbers<[1], [0], [0], [1], [0, 0, 1, 1], [], []>} : vector<8x32xbf16>, vector<32x128xbf16>, vector<8x128xf32> -> vector<8x128xf32>
    %cst_5 = arith.constant 0.000000e+00 : f32
    %7 = vector.broadcast %cst_5 : f32 to vector<8x128xf32>
    %8 = arith.cmpf oge, %6, %7 : vector<8x128xf32>
    %cst_6 = arith.constant 2.000000e-01 : f32
    %9 = vector.broadcast %cst_6 : f32 to vector<8x128xf32>
    %10 = arith.mulf %9, %6 : vector<8x128xf32>
    %11 = arith.select %8, %6, %10 : vector<8x128xi1>, vector<8x128xf32>
    %c0_7 = arith.constant 0 : index
    %c0_8 = arith.constant 0 : index
    %c0_9 = arith.constant 0 : index
    %12 = vector.load %arg6[%c0_7, %c0_8, %c0_9] : memref<1x8x128xf32, #tpu.memory_space<vmem>>, vector<1x8x128xf32>
    %13 = vector.shape_cast %12 : vector<1x8x128xf32> to vector<8x128xf32>
    %14 = arith.addf %13, %11 : vector<8x128xf32>
    %c0_10 = arith.constant 0 : index
    %c0_11 = arith.constant 0 : index
    %c0_12 = arith.constant 0 : index
    %15 = vector.load %arg6[%c0_10, %c0_11, %c0_12] : memref<1x8x128xf32, #tpu.memory_space<vmem>>, vector<1x8x128xf32>
    %16 = vector.shape_cast %15 : vector<1x8x128xf32> to vector<8x128xf32>
    %17 = vector.shape_cast %14 : vector<8x128xf32> to vector<1x8x128xf32>
    tpu.vector_store %arg6[%c0_10, %c0_11, %c0_12], %17 {strides = array<i32>} : memref<1x8x128xf32, #tpu.memory_space<vmem>>, vector<1x8x128xf32>,
    %c1_i32 = arith.constant 1 : i32
    %18 = arith.cmpi eq, %arg2, %c1_i32 : i32
    %19 = arith.extui %18 : i1 to i32
    %c0_i32_13 = arith.constant 0 : i32
    %20 = arith.cmpi ne, %19, %c0_i32_13 : i32
    scf.if %20 {
      %c0_14 = arith.constant 0 : index
      %c0_15 = arith.constant 0 : index
      %c0_16 = arith.constant 0 : index
      %21 = vector.load %arg6[%c0_14, %c0_15, %c0_16] : memref<1x8x128xf32, #tpu.memory_space<vmem>>, vector<1x8x128xf32>
      %22 = vector.shape_cast %21 : vector<1x8x128xf32> to vector<8x128xf32>
      %c1 = arith.constant 1 : index
      %23 = memref.load %arg3[%c1] : memref<2xf32, #tpu.memory_space<smem>>
      %24 = vector.broadcast %23 : f32 to vector<8x128xf32>
      %25 = arith.mulf %22, %24 : vector<8x128xf32>
      %c0_17 = arith.constant 0 : index
      %c0_18 = arith.constant 0 : index
      %c0_19 = arith.constant 0 : index
      %26 = vector.load %arg6[%c0_17, %c0_18, %c0_19] : memref<1x8x128xf32, #tpu.memory_space<vmem>>, vector<1x8x128xf32>
      %27 = vector.shape_cast %26 : vector<1x8x128xf32> to vector<8x128xf32>
      %28 = vector.shape_cast %25 : vector<8x128xf32> to vector<1x8x128xf32>
      tpu.vector_store %arg6[%c0_17, %c0_18, %c0_19], %28 {strides = array<i32>} : memref<1x8x128xf32, #tpu.memory_space<vmem>>, vector<1x8x128xf32>,
    } else {
    }
    return
  }
  func.func @transform_0(%arg0: i32, %arg1: i32, %arg2: i32) -> i32 {
    %c0_i32 = arith.constant 0 : i32
    %c0_i32_0 = arith.constant 0 : i32
    return %c0_i32 : i32
  }
  func.func @transform_1(%arg0: i32, %arg1: i32, %arg2: i32) -> (i32, i32) {
    %c0_i32 = arith.constant 0 : i32
    %c0_i32_0 = arith.constant 0 : i32
    %c0_i32_1 = arith.constant 0 : i32
    return %c0_i32, %c0_i32_0 : i32, i32
  }
  func.func @transform_2(%arg0: i32, %arg1: i32, %arg2: i32) -> (i32, i32, i32) {
    %c2_i32 = arith.constant 2 : i32
    %0 = arith.muli %arg0, %c2_i32 : i32
    %1 = arith.addi %0, %arg2 : i32
    %c0_i32 = arith.constant 0 : i32
    %c0_i32_0 = arith.constant 0 : i32
    return %1, %c0_i32, %arg1 : i32, i32, i32
  }
  func.func @transform_3(%arg0: i32, %arg1: i32, %arg2: i32) -> (i32, i32, i32) {
    %c0_i32 = arith.constant 0 : i32
    %c0_i32_0 = arith.constant 0 : i32
    return %arg0, %c0_i32, %arg1 : i32, i32, i32
  }
}

</mosaic_0001>

<llo_original>
// kernel: tpu_custom_call.1
$region0: #{tpu_custom_call.1}
  #allocation0 [shape = 'u32[]', space=smem, size = 0x4, offset = 0x4, fixed_abs, tag = 'smem constant byte address 0x4 - core index']
  #allocation1 [shape = 'u32[144,128]{1,0:T(1,128)}', space=vmem, size = 0x12000, scoped, tag = 'internal scratch']
  %s0 = inlined_call_operand.hbm [shape: f32[2], index: 0, kind: input, shape index: {}]
  %s1 = inlined_call_operand.hbm [shape: bf16[8,32], index: 1, kind: input, shape index: {}]
  %s2 = inlined_call_operand.hbm [shape: bf16[4,32,128], index: 2, kind: input, shape index: {}]
  %s3 = inlined_call_operand.hbm [shape: f32[2,8,128], index: 3, kind: output, shape index: {}]
  %s4 = sld [smem:[#allocation0]]
  $region65: #{tpu_custom_call.1} parent=0
    _
  %s6 = ssub.s32 1, %s4
  %s7 = scalar_select 0, %s6, %s4
  $region1: #{tpu_custom_call.1} parent=0
    #allocation2 [shape = 'u8[512]{0}', space=smem, size = 0x200, scoped, tag = 'input window, operand 0, single buffered']
    #allocation3 [shape = 's32[2]{0}', space=sflag, size = 0x8, scoped, tag = 'scoped memory for tpu_custom_call.1']
    #allocation4 [shape = 's32[2]{0}', space=sflag, size = 0x8, scoped, tag = 'scoped memory for tpu_custom_call.1']
    #allocation5 [shape = 's32[2]{0}', space=sflag, size = 0x8, scoped, tag = 'scoped memory for tpu_custom_call.1']
    #allocation6 [shape = 'u8[2048]{0}', space=vmem, size = 0x800, scoped, tag = 'input window, operand 1, single buffered']
    #allocation7 [shape = 'u8[16384]{0}', space=vmem, size = 0x4000, scoped, tag = 'input window, operand 2']
    #allocation8 [shape = 's32[2]{0}', space=sflag, size = 0x8, scoped, tag = 'scoped memory for tpu_custom_call.1']
    #allocation9 [shape = 'u8[8192]{0}', space=vmem, size = 0x2000, scoped, tag = 'output window, operand 0']
    %8 = vsyncpa [#allocation5], 0
    %9 = vsyncpa [#allocation3], 0
    %10 = vsyncpa [#allocation8], 0
    %s11 = scalar_lea.sflag [#allocation8], 1
    %12 = vsyncpa %s11, 0
    %13 = vsyncpa [#allocation4], 0
    %s14 = scalar_lea.sflag [#allocation4], 1
    %15 = vsyncpa %s14, 0
    loop: start=0, step=1, limit=6
    $region2: #{tpu_custom_call.1} parent=1 // loop_pre_header
      _
    $region3: #{tpu_custom_call.1} parent=1 // loop_header
      %s17 = sphi 0, %s21
      %p18 = scmp.ge.s32.totalorder %s17, 6
      %s24 = sphi 0, %s43
      %s25 = sphi 0, %s39
      %s26 = sphi 0, %s35
      %s27 = sphi 0, %s24
      %s28 = sphi 0, %s25
      %s29 = sphi 0, %s26
      %s30 = sphi 0, %s27
      %s31 = sphi 0, %s28
      %s32 = sphi 0, %s29
      %s44 = sphi 0, %s44
      %s46 = sphi 0, %s44
      %s47 = sphi 0, %s46
      %s61 = sphi 0, %s47
      %s65 = sphi 0, %s65
      %s67 = sphi 0, %s65
      %s68 = sphi 0, %s67
      %s82 = sphi 0, %s68
      %s94 = sphi 0, %s96
      %s97 = sphi 0, %s94
      %s98 = sphi 0, %s97
      %s114 = sphi 0, %s98
      %s122 = sphi 0, %s124
      %s125 = sphi 0, %s122
      %s126 = sphi 0, %s125
      %s142 = sphi 0, %s126
    $region4: #{tpu_custom_call.1} parent=1 // loop_header_branch
      %20 = sbr.rel (%p18) target = $region8
    $region5: #{tpu_custom_call.1} parent=1 // loop_body
      %s22 = ssub.s32 %s17, 1
      %s23 = ssub.s32 %s17, 2
      %s33 = sadd.s32 1, %s26
      %p34 = scmp.ge.s32.totalorder %s33, 2
      %s35 = scalar_select %p34, 0, %s33
      %s36 = sadd.s32 1, %s25
      %s37 = scalar_select %p34, %s36, %s25
      %p38 = scmp.ge.s32.totalorder %s37, 1
      %s39 = scalar_select %p38, 0, %s37
      %s40 = sadd.s32 1, %s24
      %s41 = scalar_select %p38, %s40, %s24
      %p42 = scmp.ge.s32.totalorder %s41, 2
      %s43 = scalar_select %p42, 0, %s41
      %s45 = sadd.s32 %s44, 1
      %p48 = scmp.eq.s32.totalorder %s17, 3
      %p49 = scmp.ne.s32.totalorder %s44, %s46
      %p50 = scmp.eq.s32.totalorder %s17, 0
      %p51 = por %p49, %p50
      %p52 = scmp.ne.s32.totalorder %s44, %s46
      %p53 = scmp.eq.s32.totalorder %s22, 3
      %p54 = por %p52, %p53
      %p55 = scmp.ne.s32.totalorder %s46, %s47
      %p56 = scmp.eq.s32.totalorder %s22, 0
      %p57 = por %p55, %p56
      %p58 = scmp.ne.s32.totalorder %s46, %s47
      %p59 = scmp.eq.s32.totalorder %s23, 3
      %p60 = por %p58, %p59
      %p62 = scmp.ne.s32.totalorder %s47, %s61
      %p63 = scmp.eq.s32.totalorder %s23, 0
      %p64 = por %p62, %p63
      %s66 = sadd.s32 %s65, 1
      %p69 = scmp.eq.s32.totalorder %s17, 3
      %p70 = scmp.ne.s32.totalorder %s65, %s67
      %p71 = scmp.eq.s32.totalorder %s17, 0
      %p72 = por %p70, %p71
      %p73 = scmp.ne.s32.totalorder %s65, %s67
      %p74 = scmp.eq.s32.totalorder %s22, 3
      %p75 = por %p73, %p74
      %p76 = scmp.ne.s32.totalorder %s67, %s68
      %p77 = scmp.eq.s32.totalorder %s22, 0
      %p78 = por %p76, %p77
      %p79 = scmp.ne.s32.totalorder %s67, %s68
      %p80 = scmp.eq.s32.totalorder %s23, 3
      %p81 = por %p79, %p80
      %p83 = scmp.ne.s32.totalorder %s68, %s82
      %p84 = scmp.eq.s32.totalorder %s23, 0
      %p85 = por %p83, %p84
      %s86 = smul.u32 %s24, 2
      %s87 = sadd.s32 %s86, %s26
      %s88 = smul.u32 %s43, 2
      %s89 = sadd.s32 %s88, %s35
      %s90 = ssub.s32 %s87, %s89
      %s91 = ssub.s32 %s25, %s39
      %s92 = sor.u32 %s90, %s91
      %p93 = scmp.eq.s32.totalorder %s92, 0
      %s95 = sadd.s32 %s94, 1
      %s96 = scalar_select %p93, %s94, %s95
      %p99 = pneg %p93
      %p100 = scmp.eq.s32.totalorder %s17, 3
      %p101 = por %p99, %p100
      %p102 = scmp.ne.s32.totalorder %s94, %s97
      %p103 = scmp.eq.s32.totalorder %s17, 0
      %p104 = por %p102, %p103
      %p105 = scmp.ne.s32.totalorder %s94, %s97
      %p106 = scmp.eq.s32.totalorder %s22, 3
      %p107 = por %p105, %p106
      %p108 = scmp.ne.s32.totalorder %s97, %s98
      %p109 = scmp.eq.s32.totalorder %s22, 0
      %p110 = por %p108, %p109
      %p111 = scmp.ne.s32.totalorder %s97, %s98
      %p112 = scmp.eq.s32.totalorder %s23, 3
      %p113 = por %p111, %p112
      %p115 = scmp.ne.s32.totalorder %s98, %s114
      %p116 = scmp.eq.s32.totalorder %s23, 0
      %p117 = por %p115, %p116
      %s118 = ssub.s32 %s24, %s43
      %s119 = ssub.s32 %s25, %s39
      %s120 = sor.u32 %s118, %s119
      %p121 = scmp.eq.s32.totalorder %s120, 0
      %s123 = sadd.s32 %s122, 1
      %s124 = scalar_select %p121, %s122, %s123
      %p127 = pneg %p121
      %p128 = scmp.eq.s32.totalorder %s17, 3
      %p129 = por %p127, %p128
      %p130 = scmp.ne.s32.totalorder %s122, %s125
      %p131 = scmp.eq.s32.totalorder %s17, 0
      %p132 = por %p130, %p131
      %p133 = scmp.ne.s32.totalorder %s122, %s125
      %p134 = scmp.eq.s32.totalorder %s22, 3
      %p135 = por %p133, %p134
      %p136 = scmp.ne.s32.totalorder %s125, %s126
      %p137 = scmp.eq.s32.totalorder %s22, 0
      %p138 = por %p136, %p137
      %p139 = scmp.ne.s32.totalorder %s125, %s126
      %p140 = scmp.eq.s32.totalorder %s23, 3
      %p141 = por %p139, %p140
      %p143 = scmp.ne.s32.totalorder %s126, %s142
      %p144 = scmp.eq.s32.totalorder %s23, 0
      %p145 = por %p143, %p144
      %p146 = scmp.le.s32.totalorder 1, %s17
      %p147 = scmp.lt.s32.totalorder %s17, 5
      %p148 = pnand %p146, %p147
      %p149 = pneg %p148
      // Predicated region
      $region9: #{tpu_custom_call.1} parent=5 // pred_check
        _
      $region10: #{tpu_custom_call.1} parent=5 // pred_check_branch
        %151 = sbr.rel (%p148) target = $region12
      $region11: #{tpu_custom_call.1} parent=5 // pred_region
        %s152 = ssub.s32 %s17, 1
        // Predicated region
        $region13: #{tpu_custom_call.1} parent=11 // pred_check
          %p153 = pneg %p57
        $region14: #{tpu_custom_call.1} parent=11 // pred_check_branch
          %155 = sbr.rel (%p153) target = $region16
        $region15: #{tpu_custom_call.1} parent=11 // pred_region
          %s157 = ssub.s32 16, 16
          %158 = vsyncadd [#allocation5], %s157
          %161 = dma.hbm_to_smem %s0, 16, [#allocation2], [#allocation5]
        $region16: #{tpu_custom_call.1} parent=11 // pred_fallthru
          _
        // Predicated region
        $region17: #{tpu_custom_call.1} parent=11 // pred_check
          %p162 = pneg %p78
        $region18: #{tpu_custom_call.1} parent=11 // pred_check_branch
          %164 = sbr.rel (%p162) target = $region20
        $region19: #{tpu_custom_call.1} parent=11 // pred_region
          %s166 = ssub.s32 64, 64
          %167 = vsyncadd [#allocation3], %s166
          %s169 = sshll.u32 [#allocation6], 4
          %s170 = int_to_ptr.vmem [resolvable:$true] %s169
          %172 = dma.hbm_to_vmem [thread:$0]  %s1, 64, %s170, [#allocation3]
        $region20: #{tpu_custom_call.1} parent=11 // pred_fallthru
          _
      $region12: #{tpu_custom_call.1} parent=5 // pred_fallthru
        _
      %p173 = scmp.lt.s32.totalorder %s17, 4
      // Predicated region
      $region21: #{tpu_custom_call.1} parent=5 // pred_check
        %p174 = pneg %p173
      $region22: #{tpu_custom_call.1} parent=5 // pred_check_branch
        %176 = sbr.rel (%p174) target = $region24
      $region23: #{tpu_custom_call.1} parent=5 // pred_region
        // Predicated region
        $region25: #{tpu_custom_call.1} parent=23 // pred_check
          %p177 = pneg %p104
        $region26: #{tpu_custom_call.1} parent=23 // pred_check_branch
          %179 = sbr.rel (%p177) target = $region28
        $region27: #{tpu_custom_call.1} parent=23 // pred_region
          %s180 = sand.u32 %s94, 1
          %s181 = scalar_lea.sflag [#allocation8], %s180
          %s182 = sand.u32 %s94, 1
          %s183 = smul.addr %s182, 16
          %s184 = scalar_lea.vmem [#allocation7], %s183
          %s185 = smul.u32 %s24, 2
          %s186 = sadd.s32 %s185, %s26
          %s188 = ssub.s32 256, 256
          %189 = vsyncadd %s181, %s188
          %s190 = smul.addr %s186, 4
          %s191 = sadd.s32 %s25, %s190
          %s192 = smul.addr %s191, 64
          %s193 = scalar_lea.hbm %s2, %s192
          %s194 = sshll.u32 %s184, 4
          %s195 = int_to_ptr.vmem [resolvable:$true] %s194
          %200 = dma.hbm_to_vmem [thread:$0]  %s193, 256, %s195, %s181, 64, 64, 4
        $region28: #{tpu_custom_call.1} parent=23 // pred_fallthru
          _
      $region24: #{tpu_custom_call.1} parent=5 // pred_fallthru
        _
      %p201 = scmp.le.s32.totalorder 1, %s17
      %p202 = scmp.lt.s32.totalorder %s17, 5
      %p203 = pnand %p201, %p202
      %p204 = pneg %p203
      // Predicated region
      $region29: #{tpu_custom_call.1} parent=5 // pred_check
        _
      $region30: #{tpu_custom_call.1} parent=5 // pred_check_branch
        %206 = sbr.rel (%p203) target = $region32
      $region31: #{tpu_custom_call.1} parent=5 // pred_region
        %s207 = ssub.s32 %s17, 1
        // Predicated region
        $region33: #{tpu_custom_call.1} parent=31 // pred_check
          %p208 = pneg %p57
        $region34: #{tpu_custom_call.1} parent=31 // pred_check_branch
          %210 = sbr.rel (%p208) target = $region36
        $region35: #{tpu_custom_call.1} parent=31 // pred_region
          %211 = dma.done [#allocation5], 16
        $region36: #{tpu_custom_call.1} parent=31 // pred_fallthru
          _
        // Predicated region
        $region37: #{tpu_custom_call.1} parent=31 // pred_check
          %p212 = pneg %p78
        $region38: #{tpu_custom_call.1} parent=31 // pred_check_branch
          %214 = sbr.rel (%p212) target = $region40
        $region39: #{tpu_custom_call.1} parent=31 // pred_region
          %215 = dma.done [#allocation3], 64
        $region40: #{tpu_custom_call.1} parent=31 // pred_fallthru
          _
        %s216 = sand.u32 %s97, 1
        %s217 = scalar_lea.sflag [#allocation8], %s216
        %s218 = sand.u32 %s97, 1
        %s219 = smul.addr %s218, 16
        %s220 = scalar_lea.vmem [#allocation7], %s219
        // Predicated region
        $region41: #{tpu_custom_call.1} parent=31 // pred_check
          %p221 = pneg %p110
        $region42: #{tpu_custom_call.1} parent=31 // pred_check_branch
          %223 = sbr.rel (%p221) target = $region44
        $region43: #{tpu_custom_call.1} parent=31 // pred_region
          %224 = dma.done %s217, 256
        $region44: #{tpu_custom_call.1} parent=31 // pred_fallthru
          _
        %225 = sfence
        %p226 = pneg %p57
        %p227 = pneg %p54
        %p228 = pneg %p78
        %p229 = pneg %p75
        %s230 = sand.u32 %s97, 1
        %s231 = scalar_lea.sflag [#allocation8], %s230
        %s232 = sand.u32 %s97, 1
        %s233 = smul.addr %s232, 16
        %s234 = scalar_lea.vmem [#allocation7], %s233
        %p235 = pneg %p110
        %p236 = pneg %p107
        %p237 = pneg %p138
        %p238 = pneg %p135
        %s239 = sand.u32 %s125, 1
        %s240 = scalar_lea.sflag [#allocation4], %s239
        %s241 = sand.u32 %s125, 1
        %s242 = smul.addr %s241, 8
        %s243 = scalar_lea.vmem [#allocation9], %s242
        %s244 = smul.u32 %s27, 2
        %s245 = sadd.s32 %s244, %s29
        %p247 = scmp.eq.s32.totalorder %s29, 0
        // Predicated region
        $region45: #{tpu_custom_call.1} parent=31 // pred_check
          %p248 = pneg %p247
        $region46: #{tpu_custom_call.1} parent=31 // pred_check_branch
          %250 = sbr.rel (%p248) target = $region48
        $region47: #{tpu_custom_call.1} parent=31 // pred_region
          %251 = vst [vmem:[%s243] sm:$0xff] 0.0
        $region48: #{tpu_custom_call.1} parent=31 // pred_fallthru
          _
        %v252 = vld [vmem:[#allocation6] sm:$0xf]
        %v253 = vld [vmem:[%s220] sm:$0xf]
        %v254 = vld [vmem:[%s220 + $0x4] sm:$0xf]
        %v255 = vld [vmem:[%s220 + $0x8] sm:$0xf]
        %v256 = vld [vmem:[%s220 + $0xc] sm:$0xf]
        %v261 = vunpack.c.l.b16 %v253
        %v262 = vunpack.c.l.b16 %v254
        %v263 = vunpack.c.l.b16 %v255
        %v264 = vunpack.c.l.b16 %v256
        %v265 = vpack.c.b16 %v262, %v261
        %v266 = vpack.c.b16 %v264, %v263
        %vm269 = vcmask 261120
        %v271 = vsel %vm269, %v252, 0
        %273 = vmatprep.subr.bf16.mxu0 0
        %274 = vmatpush1.bf16.msra.mxu0 %v265
        %275 = vmatprep.subr.bf16.mxu0 0
        %276 = vmatpush1.bf16.msra.mxu0 %v266
        %277 = vmatprep.subr.bf16.mxu0 0
        %278 = vmatpush1.bf16.msra.mxu0 0
        %279 = vmatprep.subr.bf16.mxu0 0
        %280 = vmatpush1.bf16.msra.mxu0 0
        %281 = vmatprep.subr.bf16.mxu0 0
        %282 = vmatpush1.bf16.msra.mxu0 0
        %283 = vmatprep.subr.bf16.mxu0 0
        %284 = vmatpush1.bf16.msra.mxu0 0
        %285 = vmatprep.subr.bf16.mxu0 0
        %286 = vmatpush1.bf16.msra.mxu0 0
        %287 = vmatprep.subr.bf16.mxu0 0
        %288 = vmatpush1.bf16.msra.mxu0 0
        %289 = vmatprep.subr.bf16.mxu0 0
        %290 = vmatpush1.bf16.msra.mxu0 0
        %291 = vmatprep.subr.bf16.mxu0 0
        %292 = vmatpush1.bf16.msra.mxu0 0
        %293 = vmatprep.subr.bf16.mxu0 0
        %294 = vmatpush1.bf16.msra.mxu0 0
        %295 = vmatprep.subr.bf16.mxu0 0
        %296 = vmatpush1.bf16.msra.mxu0 0
        %297 = vmatprep.subr.bf16.mxu0 0
        %298 = vmatpush1.bf16.msra.mxu0 0
        %299 = vmatprep.subr.bf16.mxu0 0
        %300 = vmatpush1.bf16.msra.mxu0 0
        %301 = vmatprep.subr.bf16.mxu0 0
        %302 = vmatpush1.bf16.msra.mxu0 0
        %303 = vmatprep.subr.bf16.mxu0 0
        %304 = vmatpush1.bf16.msra.mxu0 0
        %305 = vmatprep.mubr.bf16.mxu0 0
        %306 = vmatmul.mubr.bf16.gmra.mrb[0].mxu0 %v271
        %v307 = vpop.f32.mrb[0].mxu0
        %v308 = vadd.f32 0.0, %v307
        %v309 = vpop.f32.mrb[0].mxu0
        %v310 = vpop.f32.mrb[0].mxu0
        %v311 = vpop.f32.mrb[0].mxu0
        %312 = vdwg.mxu0
        %vm313 = vcmp.ge.f32.partialorder %v308, 0.0
        %v314 = vmul.f32 %v308, 0.2
        %v315 = vsel %vm313, %v308, %v314
        %v316 = vld [vmem:[%s243] sm:$0xff]
        %v317 = vadd.f32 %v316, %v315
        %318 = vst [vmem:[%s243] sm:$0xff] %v317
        %p319 = scmp.eq.s32.totalorder %s29, 1
        // Predicated region
        $region49: #{tpu_custom_call.1} parent=31 // pred_check
          %p320 = pneg %p319
        $region50: #{tpu_custom_call.1} parent=31 // pred_check_branch
          %322 = sbr.rel (%p320) target = $region52
        $region51: #{tpu_custom_call.1} parent=31 // pred_region
          %v323 = vld [vmem:[%s243] sm:$0xff]
          %s324 = sld [smem:[#allocation2 + $0x1]]
          %v325 = vstv %s324
          %v326 = vmul.f32 %v323, %v325
          %327 = vst [vmem:[%s243] sm:$0xff] %v326
        $region52: #{tpu_custom_call.1} parent=31 // pred_fallthru
          _
        %s328 = sand.u32 %s125, 1
        %s329 = scalar_lea.sflag [#allocation4], %s328
        %s330 = sand.u32 %s125, 1
        %s331 = smul.addr %s330, 8
        %s332 = scalar_lea.vmem [#allocation9], %s331
        // Predicated region
        $region53: #{tpu_custom_call.1} parent=31 // pred_check
          %p333 = pneg %p135
        $region54: #{tpu_custom_call.1} parent=31 // pred_check_branch
          %335 = sbr.rel (%p333) target = $region56
        $region55: #{tpu_custom_call.1} parent=31 // pred_region
          %s337 = ssub.s32 128, 128
          %338 = vsyncadd %s329, %s337
          %s339 = sadd.s32 %s28, %s27
          %s340 = smul.addr %s339, 128
          %s341 = scalar_lea.hbm %s3, %s340
          %s343 = sshll.u32 %s332, 4
          %s344 = int_to_ptr.vmem [resolvable:$true] %s343
          %346 = dma.vmem_to_hbm [thread:$0]  %s344, 128, %s341, %s329
        $region56: #{tpu_custom_call.1} parent=31 // pred_fallthru
          _
      $region32: #{tpu_custom_call.1} parent=5 // pred_fallthru
        _
      %p347 = scmp.le.s32.totalorder 2, %s17
      // Predicated region
      $region57: #{tpu_custom_call.1} parent=5 // pred_check
        %p348 = pneg %p347
      $region58: #{tpu_custom_call.1} parent=5 // pred_check_branch
        %350 = sbr.rel (%p348) target = $region60
      $region59: #{tpu_custom_call.1} parent=5 // pred_region
        %s351 = ssub.s32 %s17, 2
        // Predicated region
        $region61: #{tpu_custom_call.1} parent=59 // pred_check
          %p352 = pneg %p141
        $region62: #{tpu_custom_call.1} parent=59 // pred_check_branch
          %354 = sbr.rel (%p352) target = $region64
        $region63: #{tpu_custom_call.1} parent=59 // pred_region
          %s355 = sand.u32 %s126, 1
          %s356 = scalar_lea.sflag [#allocation4], %s355
          %s357 = sand.u32 %s126, 1
          %s358 = smul.addr %s357, 8
          %s359 = scalar_lea.vmem [#allocation9], %s358
          %360 = dma.done %s356, 128
        $region64: #{tpu_custom_call.1} parent=59 // pred_fallthru
          _
      $region60: #{tpu_custom_call.1} parent=5 // pred_fallthru
        _
    $region6: #{tpu_custom_call.1} parent=1 // loop_footer
      %s21 = sadd.s32 1, %s17
    $region7: #{tpu_custom_call.1} parent=1 // loop_footer_branch
      %16 = sbr.rel target = $region3
    $region8: #{tpu_custom_call.1} parent=1 // loop_exit
      _
    %361 = vsyncpa [#allocation3], 1
    %s362 = scalar_lea.sflag [#allocation3], 1
    %363 = vsyncpa %s362, 1
    %364 = vsyncpa [#allocation8], 1
    %s365 = scalar_lea.sflag [#allocation8], 1
    %366 = vsyncpa %s365, 1
    %367 = vsyncpa [#allocation4], 1
    %s368 = scalar_lea.sflag [#allocation4], 1
    %369 = vsyncpa %s368, 1
    %370 = vsyncpa [#allocation5], 1
    %s371 = scalar_lea.sflag [#allocation5], 1
    %372 = vsyncpa %s371, 1

</llo_original>
